<compile_context>
chip_gen: v5e
topology: v5e:2x2
jax: 0.10.0
libtpu: 0.0.40
codegen_flags: <defaults>
</compile_context>

<pallas_src>
import functools

import jax
import jax.numpy as jnp
from jax import lax
from jax.experimental import pallas as pl
from jax.experimental.pallas import tpu as pltpu

LANES = 128


def _dropout_train_kernel(seed_ref, x_ref, o_ref, *, block_rows, thresh):
    """Bernoulli(p) mask-multiply on one (block_rows, LANES) tile."""
    i = pl.program_id(0)
    shape = x_ref.shape  # (block_rows, LANES)

    # Global element index of every slot in this tile.
    row = lax.broadcasted_iota(jnp.int32, shape, 0) + i * block_rows
    col = lax.broadcasted_iota(jnp.int32, shape, 1)
    idx = row.astype(jnp.uint32) * jnp.uint32(shape[1]) + col.astype(jnp.uint32)

    # Stateless hash: fold in the seed, then murmur3 finalizer (fmix32).
    h = idx + seed_ref[0].astype(jnp.uint32) * jnp.uint32(0x9E3779B9)
    h = h ^ (h >> 16)
    h = h * jnp.uint32(0x85EBCA6B)
    h = h ^ (h >> 13)
    h = h * jnp.uint32(0xC2B2AE35)
    h = h ^ (h >> 16)

    # torch.bernoulli(p): keep (mask==1) with probability p.
    keep = h < jnp.uint32(thresh)
    xv = x_ref[...]
    o_ref[...] = jnp.where(keep, xv, jnp.zeros_like(xv))


def _scale_kernel(x_ref, o_ref, *, p):
    o_ref[...] = x_ref[...] * jnp.asarray(p, dtype=x_ref.dtype)


def dropout(x, p: float = 0.5, seed: int = 0, training: bool = True):
    """Pallas implementation of the reference Dropout.forward."""
    orig_shape = x.shape
    dtype = x.dtype
    n = x.size

    itemsize = jnp.dtype(dtype).itemsize
    pack = max(1, 4 // itemsize)          # elements per 32-bit sublane slot
    sublanes = 8 * pack                   # 8 (f32), 16 (bf16), 32 (int8/fp8)

    rows = pl.cdiv(n, LANES)
    rows_p = ((rows + sublanes - 1) // sublanes) * sublanes
    pad = rows_p * LANES - n

    flat = x.reshape(-1)
    if pad:
        flat = jnp.pad(flat, (0, pad))    # only for ragged sizes
    xf = flat.reshape(rows_p, LANES)

    # ~2 MiB blocks per buffer: big enough to hit the HBM roofline, small
    # enough that (2 in + 2 out buffers + mask temps) stays far under the
    # v7x 32 MiB default scoped-VMEM limit.
    target_bytes = 2 * 1024 * 1024
    tr = max(sublanes, min(rows_p, target_bytes // (LANES * itemsize)))
    tr = (tr // sublanes) * sublanes
    grid = (pl.cdiv(rows_p, tr),)

    cparams = pltpu.CompilerParams(dimension_semantics=("parallel",))

    if training:
        # Integer threshold: keep iff hash < p * 2^32 (quantized to 2^-32).
        thresh = int(min(max(float(p), 0.0), 1.0) * 4294967296.0)
        thresh = min(thresh, 4294967295)  # p == 1.0 -> keep with prob 1 - 2^-32
        seed_arr = jnp.asarray([seed], dtype=jnp.int32)
        out = pl.pallas_call(
            functools.partial(_dropout_train_kernel, block_rows=tr, thresh=thresh),
            out_shape=jax.ShapeDtypeStruct(xf.shape, xf.dtype),
            grid_spec=pltpu.PrefetchScalarGridSpec(
                num_scalar_prefetch=1,
                grid=grid,
                in_specs=[pl.BlockSpec((tr, LANES), lambda i, seed_ref: (i, 0))],
                out_specs=pl.BlockSpec((tr, LANES), lambda i, seed_ref: (i, 0)),
            ),
            compiler_params=cparams,
        )(seed_arr, xf)
    else:
        out = pl.pallas_call(
            functools.partial(_scale_kernel, p=float(p)),
            out_shape=jax.ShapeDtypeStruct(xf.shape, xf.dtype),
            grid=grid,
            in_specs=[pl.BlockSpec((tr, LANES), lambda i: (i, 0))],
            out_specs=pl.BlockSpec((tr, LANES), lambda i: (i, 0)),
            compiler_params=cparams,
        )(xf)

    out = out.reshape(-1)
    if pad:
        out = out[:n]
    return out.reshape(orig_shape)


if __name__ == "__main__":
    key = jax.random.PRNGKey(0)
    x = jax.random.normal(key, (2, 4, 16, 16), dtype=jnp.float32)

    # Training path (module default): mask-multiply with Bernoulli(p) mask.
    y_train = dropout(x, p=0.5, seed=0, training=True)
    jax.block_until_ready(y_train)
    # Every element is either zeroed or passed through unchanged.
    assert bool(jnp.all((y_train == 0) | (y_train == x)))
    # Keep fraction should be roughly p.
    frac = float(jnp.mean((y_train == x).astype(jnp.float32)))
    assert 0.3 < frac < 0.7, frac

    # Eval path: x * p
    y_eval = dropout(x, p=0.5, training=False)
    jax.block_until_ready(y_eval)
    assert bool(jnp.allclose(y_eval, x * 0.5))

    print("KERNEL_OK")
</pallas_src>

<mosaic_0001>
module attributes {stable_mosaic.version = 11 : i64} {
  func.func @_dropout_train_kernel(%arg0: i32, %arg1: memref<1xi32, #tpu.memory_space<smem>>, %arg2: memref<16x128xf32, #tpu.memory_space<vmem>>, %arg3: memref<16x128xf32, #tpu.memory_space<vmem>>) attributes {dimension_semantics = [#tpu.dimension_semantics<parallel>], iteration_bounds = array<i64: 1>, scalar_prefetch = 1 : i64, scratch_operands = 0 : i64, tpu.core_type = #tpu.core_type<tc>, window_params = [{transform_indices = @transform_0, window_bounds = array<i64: 16, 128>}, {transform_indices = @transform_1, window_bounds = array<i64: 16, 128>}]} {
    %0 = tpu.iota {dimensions = array<i32: 0>} : vector<16x128xi32>
    %c16_i32 = arith.constant 16 : i32
    %1 = arith.muli %arg0, %c16_i32 : i32
    %2 = vector.broadcast %1 : i32 to vector<16x128xi32>
    %3 = arith.addi %0, %2 : vector<16x128xi32>
    %4 = tpu.iota {dimensions = array<i32: 1>} : vector<16x128xi32>
    %c128_i32 = arith.constant 128 : i32
    %5 = vector.broadcast %c128_i32 : i32 to vector<16x128xi32>
    %6 = arith.muli %3, %5 : vector<16x128xi32>
    %7 = arith.addi %6, %4 : vector<16x128xi32>
    %c0 = arith.constant 0 : index
    %8 = memref.load %arg1[%c0] : memref<1xi32, #tpu.memory_space<smem>>
    %c-1640531527_i32 = arith.constant -1640531527 : i32
    %9 = arith.muli %8, %c-1640531527_i32 : i32
    %10 = vector.broadcast %9 : i32 to vector<16x128xi32>
    %11 = arith.addi %7, %10 : vector<16x128xi32>
    %c16_i32_0 = arith.constant 16 : i32
    %12 = vector.broadcast %c16_i32_0 : i32 to vector<16x128xi32>
    %13 = arith.shrui %11, %12 : vector<16x128xi32>
    %14 = arith.xori %11, %13 : vector<16x128xi32>
    %c-2048144789_i32 = arith.constant -2048144789 : i32
    %15 = vector.broadcast %c-2048144789_i32 : i32 to vector<16x128xi32>
    %16 = arith.muli %14, %15 : vector<16x128xi32>
    %c13_i32 = arith.constant 13 : i32
    %17 = vector.broadcast %c13_i32 : i32 to vector<16x128xi32>
    %18 = arith.shrui %16, %17 : vector<16x128xi32>
    %19 = arith.xori %16, %18 : vector<16x128xi32>
    %c-1028477387_i32 = arith.constant -1028477387 : i32
    %20 = vector.broadcast %c-1028477387_i32 : i32 to vector<16x128xi32>
    %21 = arith.muli %19, %20 : vector<16x128xi32>
    %c16_i32_1 = arith.constant 16 : i32
    %22 = vector.broadcast %c16_i32_1 : i32 to vector<16x128xi32>
    %23 = arith.shrui %21, %22 : vector<16x128xi32>
    %24 = arith.xori %21, %23 : vector<16x128xi32>
    %c-2147483648_i32 = arith.constant -2147483648 : i32
    %25 = vector.broadcast %c-2147483648_i32 : i32 to vector<16x128xi32>
    %26 = arith.cmpi ult, %24, %25 : vector<16x128xi32>
    %c0_2 = arith.constant 0 : index
    %c0_3 = arith.constant 0 : index
    %27 = vector.load %arg2[%c0_2, %c0_3] : memref<16x128xf32, #tpu.memory_space<vmem>>, vector<16x128xf32>
    %cst = arith.constant 0.000000e+00 : f32
    %28 = vector.broadcast %cst : f32 to vector<16x128xf32>
    %29 = arith.select %26, %27, %28 : vector<16x128xi1>, vector<16x128xf32>
    %c0_4 = arith.constant 0 : index
    %c0_5 = arith.constant 0 : index
    %30 = vector.load %arg3[%c0_4, %c0_5] : memref<16x128xf32, #tpu.memory_space<vmem>>, vector<16x128xf32>
    tpu.vector_store %arg3[%c0_4, %c0_5], %29 {strides = array<i32>} : memref<16x128xf32, #tpu.memory_space<vmem>>, vector<16x128xf32>,
    return
  }
  func.func @transform_0(%arg0: i32, %arg1: memref<1xi32, #tpu.memory_space<smem>>) -> (i32, i32) {
    %c0_i32 = arith.constant 0 : i32
    %c0_i32_0 = arith.constant 0 : i32
    return %arg0, %c0_i32 : i32, i32
  }
  func.func @transform_1(%arg0: i32, %arg1: memref<1xi32, #tpu.memory_space<smem>>) -> (i32, i32) {
    %c0_i32 = arith.constant 0 : i32
    %c0_i32_0 = arith.constant 0 : i32
    return %arg0, %c0_i32 : i32, i32
  }
}

</mosaic_0001>

<llo_original>
// kernel: tpu_custom_call.1
$region0: #{tpu_custom_call.1}
  #allocation0 [shape = 'u32[]', space=smem, size = 0x4, offset = 0x4, fixed_abs, tag = 'smem constant byte address 0x4 - core index']
  #allocation1 [shape = 'u32[72,128]{1,0:T(1,128)}', space=vmem, size = 0x9000, scoped, tag = 'internal scratch']
  #allocation2 [shape = 's32[1]{0}', space=sflag, size = 0x4, scoped, tag = 'scoped memory for tpu_custom_call.1']
  #allocation3 [shape = 's32[1]{0:T(128)S(6)}', space=smem, size = 0x200, scoped, tag = 'prefetched SMEM operand 0']
  %s0 = inlined_call_operand.<no memory space> [shape: s32[1], index: 0, kind: input, shape index: {}]
  %s1 = inlined_call_operand.hbm [shape: f32[16,128], index: 1, kind: input, shape index: {}]
  %s2 = inlined_call_operand.hbm [shape: f32[16,128], index: 2, kind: output, shape index: {}]
  %s3 = sld [smem:[#allocation0]]
  $region18: #{tpu_custom_call.1} parent=0
    _
  %s5 = ssub.s32 1, %s3
  %s6 = scalar_select 0, %s5, %s3
  %7 = sst [smem:[#allocation3]] %s0
  $region1: #{tpu_custom_call.1} parent=0
    #allocation4 [shape = 'u8[8192]{0}', space=vmem, size = 0x2000, scoped, tag = 'input window, operand 1, single buffered']
    #allocation5 [shape = 's32[1]{0}', space=sflag, size = 0x4, scoped, tag = 'scoped memory for tpu_custom_call.1']
    #allocation6 [shape = 's32[1]{0}', space=sflag, size = 0x4, scoped, tag = 'scoped memory for tpu_custom_call.1']
    #allocation7 [shape = 'u8[8192]{0}', space=vmem, size = 0x2000, scoped, tag = 'output window, operand 0, single buffered']
    %8 = vsyncpa [#allocation5], 0
    %9 = vsyncpa [#allocation6], 0
    // Predicated region
    $region2: #{tpu_custom_call.1} parent=1 // pred_check
      _
    $region3: #{tpu_custom_call.1} parent=1 // pred_check_branch
      %11 = sbr.rel (0) target = $region5
    $region4: #{tpu_custom_call.1} parent=1 // pred_region
      %13 = vsyncadd [#allocation5], 0
      %s14 = sshll.u32 %s1, 4
      %s15 = int_to_ptr.hbm [resolvable:$true] %s14
      %s16 = sshll.u32 [#allocation4], 4
      %s17 = int_to_ptr.vmem [resolvable:$true] %s16
      %22 = dma.hbm_to_vmem [thread:$0]  %s15, 256, %s17, [#allocation5], 128, 128, 8
    $region5: #{tpu_custom_call.1} parent=1 // pred_fallthru
      _
    // Predicated region
    $region6: #{tpu_custom_call.1} parent=1 // pred_check
      _
    $region7: #{tpu_custom_call.1} parent=1 // pred_check_branch
      %24 = sbr.rel (0) target = $region9
    $region8: #{tpu_custom_call.1} parent=1 // pred_region
      %26 = dma.done [#allocation5], 256
    $region9: #{tpu_custom_call.1} parent=1 // pred_fallthru
      _
    %v27 = vlaneseq
    %v28 = vshrl.u32 %v27, 7
    %v29 = vadd.s32 %v28, 8
    %s30 = smul.u32 0, 16
    %v31 = vstv %s30
    %v32 = vadd.s32 %v28, %v31
    %v33 = vadd.s32 %v29, %v31
    %v34 = vlaneseq
    %v35 = vand.u32 %v34, 127
    %v36 = vmul.u32 %v32, 128
    %v37 = vmul.u32 %v33, 128
    %v38 = vadd.s32 %v36, %v35
    %v39 = vadd.s32 %v37, %v35
    %s40 = sld [smem:[#allocation3]]
    %s41 = smul.u32 %s40, 2654435769
    %v42 = vstv %s41
    %v43 = vadd.s32 %v38, %v42
    %v44 = vadd.s32 %v39, %v42
    %v45 = vshrl.u32 %v43, 16
    %v46 = vshrl.u32 %v44, 16
    %v47 = vxor.u32 %v43, %v45
    %v48 = vxor.u32 %v44, %v46
    %v49 = vmul.u32 %v47, 2246822507
    %v50 = vmul.u32 %v48, 2246822507
    %v51 = vshrl.u32 %v49, 13
    %v52 = vshrl.u32 %v50, 13
    %v53 = vxor.u32 %v49, %v51
    %v54 = vxor.u32 %v50, %v52
    %v55 = vmul.u32 %v53, 3266489909
    %v56 = vmul.u32 %v54, 3266489909
    %v57 = vshrl.u32 %v55, 16
    %v58 = vshrl.u32 %v56, 16
    %v59 = vxor.u32 %v55, %v57
    %v60 = vxor.u32 %v56, %v58
    %v61 = vadd.s32 %v59, 2147483648
    %vm63 = vcmp.lt.s32.totalorder %v61, 0
    %v64 = vadd.s32 %v60, 2147483648
    %vm66 = vcmp.lt.s32.totalorder %v64, 0
    %v67 = vld [vmem:[#allocation4] sm:$0xff]
    %v68 = vld [vmem:[#allocation4 + $0x8] sm:$0xff]
    %v69 = vsel %vm63, %v67, 0.0
    %v70 = vsel %vm66, %v68, 0.0
    %71 = vst [vmem:[#allocation7] sm:$0xff] %v69
    %72 = vst [vmem:[#allocation7 + $0x8] sm:$0xff] %v70
    // Predicated region
    $region10: #{tpu_custom_call.1} parent=1 // pred_check
      _
    $region11: #{tpu_custom_call.1} parent=1 // pred_check_branch
      %74 = sbr.rel (0) target = $region13
    $region12: #{tpu_custom_call.1} parent=1 // pred_region
      %76 = vsyncadd [#allocation6], 0
      %s77 = sshll.u32 [#allocation7], 4
      %s78 = int_to_ptr.vmem [resolvable:$true] %s77
      %s79 = sshll.u32 %s2, 4
      %s80 = int_to_ptr.hbm [resolvable:$true] %s79
      %85 = dma.vmem_to_hbm [thread:$0]  %s78, 256, %s80, [#allocation6], 128, 128, 8
    $region13: #{tpu_custom_call.1} parent=1 // pred_fallthru
      _
    // Predicated region
    $region14: #{tpu_custom_call.1} parent=1 // pred_check
      _
    $region15: #{tpu_custom_call.1} parent=1 // pred_check_branch
      %87 = sbr.rel (0) target = $region17
    $region16: #{tpu_custom_call.1} parent=1 // pred_region
      %89 = dma.done [#allocation6], 256
    $region17: #{tpu_custom_call.1} parent=1 // pred_fallthru
      _
    %90 = vsyncpa [#allocation5], 1
    %91 = vsyncpa [#allocation6], 1

</llo_original>
